<compile_context>
chip_gen: v7x
topology: tpu7x:2x2x1
jax: 0.10.0
libtpu: 0.0.40
codegen_flags: <defaults>
</compile_context>

<pallas_src>
import jax
import jax.numpy as jnp
from jax.experimental import pallas as pl
from jax.experimental.pallas import tpu as pltpu


# ----------------------------------------------------------------------------
# Parameter setup (plain JAX glue, deterministic) — mirrors the PyTorch module.
# ----------------------------------------------------------------------------
def gram_schmidt(vectors):
    """Sequential Gram-Schmidt matching the PyTorch reference semantics.

    vectors: (n, d) — each row is orthogonalized against the previous outputs
    and then L2-normalized.
    """
    outs = []
    for i in range(vectors.shape[0]):
        x = vectors[i]
        for y in outs:
            x = x - (jnp.dot(y, x) / jnp.dot(y, y)) * y
        x = x / jnp.linalg.norm(x)
        outs.append(x)
    return jnp.stack(outs, axis=0)


def initialize_orthogonal_filters(c, h, w, key):
    """Mirror of the PyTorch initialize_orthogonal_filters, returns (c, h, w)."""
    if h * w < c:
        assert c % (h * w) == 0, "c must be a multiple of h*w (same as PyTorch ref)"
        n = c // (h * w)
        keys = jax.random.split(key, n)
        blocks = []
        for i in range(n):
            rnd = jax.random.uniform(keys[i], (h * w, h * w), dtype=jnp.float32)
            blocks.append(gram_schmidt(rnd))
        flat = jnp.concatenate(blocks, axis=0)
    else:
        rnd = jax.random.uniform(key, (c, h * w), dtype=jnp.float32)
        flat = gram_schmidt(rnd)
    return flat.reshape(c, h, w)


# ----------------------------------------------------------------------------
# Pallas kernel: per-channel dot over the flattened spatial axis.
# ----------------------------------------------------------------------------
def _gst_kernel(x_ref, f_ref, o_ref):
    # x_ref: (TB, TC, HW), f_ref: (TC, HW)  (both in x.dtype), o_ref: (TB, TC).
    x = x_ref[...]
    f = f_ref[...]
    # Multiply in the native dtype (bf16-native VALU on v6e/v7x), accumulate the
    # lane reduction in float32, store directly in the output dtype.
    prod = x * f[None, :, :]
    o_ref[...] = jnp.sum(prod, axis=-1, dtype=jnp.float32).astype(o_ref.dtype)
    # TODO(synk): for very small HW (< 128 lanes) or bf16 inputs an MXU-based
    # reduce (dot with a ones column) or a C-on-lanes layout would avoid lane
    # padding / XLU-slot pressure; current jnp.sum path is kept for robustness.


# ----------------------------------------------------------------------------
# Tiling / VMEM heuristics.
# ----------------------------------------------------------------------------
_X_BLOCK_BUDGET_BYTES = 4 * 1024 * 1024   # per x buffer (Pallas double-buffers it)
_TARGET_GRID_STEPS = 8                    # pipeline depth / megacore sharding


def _choose_tiles(B, C, HW, itemsize):
    # Channel tile: full C when small, else 128 lanes. Legal values for the
    # (TB, TC) output block's lane dim are multiples of 128 or C itself.
    tc = C if C <= 128 else 128
    n_c = pl.cdiv(C, tc)

    # Batch tile from the per-buffer VMEM budget.
    row_bytes = tc * HW * itemsize
    tb = max(1, _X_BLOCK_BUDGET_BYTES // row_bytes)

    # Ensure enough total grid steps to pipeline / shard when the batch allows.
    target_b_steps = max(1, _TARGET_GRID_STEPS // n_c)
    if pl.cdiv(B, tb) < target_b_steps:
        tb = pl.cdiv(B, target_b_steps)

    # Sublane alignment: the (TB, TC) output block needs TB % 8 == 0 or TB == B.
    if tb >= B:
        tb = B
    else:
        tb = max(8, (tb // 8) * 8)
        if tb >= B:
            tb = B
    return int(tb), int(tc)


def _vmem_limit_bytes(x_block_bytes, f_block_bytes):
    # Generation-gated ceiling: ~48 MiB scoped on v5e/v6e (128 MiB physical),
    # ~38 MiB on v7x (64 MiB physical), via a 60%-of-physical cap.
    cap = 128 * 1024 * 1024
    try:
        info = pltpu.get_tpu_info()
        cap = int(getattr(info, "vmem_capacity_bytes", cap)) or cap
    except Exception:
        pass
    ceiling = min(48 * 1024 * 1024, (cap * 3) // 5)

    # Double-buffered x + (small, channel-chunked) filter + output blocks and
    # Mosaic internal scratch headroom.
    need = 2 * x_block_bytes + 2 * f_block_bytes + (4 << 20)
    limit = max(need, 24 * 1024 * 1024)   # sane floor
    limit = min(limit, ceiling)           # don't reserve more than the gen-safe cap
    limit = max(limit, need)              # ...unless the tiles actually need it
    return int(limit)


# ----------------------------------------------------------------------------
# Forward pass wrapper.
# ----------------------------------------------------------------------------
def gram_schmidt_transform(x, constant_filter):
    """Forward pass of GramSchmidtTransform.

    x: (B, C, h, w) float32 or bfloat16, NCHW.
    constant_filter: (C, H, W) float32.
    Returns (B, C, 1, 1) in x.dtype.
    """
    B, C, h, w = x.shape
    Cf, H, W = constant_filter.shape
    assert C == Cf, "channel mismatch"

    f = constant_filter
    if (h, w) != (H, W):
        # Fold adaptive_avg_pool2d into the filter (pool + weighted sum is
        # linear): f_exp[c, ih, iw] = f[c, ih//kh, iw//kw] / (kh*kw).
        # TODO(synk): general (non-divisible / upsampling) adaptive_avg_pool2d
        # is not implemented.
        assert h % H == 0 and w % W == 0, "only integer-factor pooling supported"
        kh, kw = h // H, w // W
        f = jnp.repeat(jnp.repeat(f, kh, axis=1), kw, axis=2) / float(kh * kw)

    HW = h * w
    x2 = x.reshape(B, C, HW)                    # free for contiguous NCHW
    # Filter in x.dtype for a native-dtype multiply (f32 accumulation in-kernel).
    f2 = f.reshape(C, HW).astype(x.dtype)

    itemsize = jnp.dtype(x.dtype).itemsize
    TB, TC = _choose_tiles(B, C, HW, itemsize)
    n_b = pl.cdiv(B, TB)
    n_c = pl.cdiv(C, TC)

    vmem_limit = _vmem_limit_bytes(TB * TC * HW * itemsize, TC * HW * itemsize)

    # TODO(synk): HW (the reduction axis) is not grid-tiled; extremely large
    # h*w with C >= 128 would need an "arbitrary" HW axis + f32 accumulator.
    out = pl.pallas_call(
        _gst_kernel,
        out_shape=jax.ShapeDtypeStruct((B, C), x.dtype),
        grid_spec=pltpu.PrefetchScalarGridSpec(
            num_scalar_prefetch=0,
            # Channel chunk outer (slow), batch chunk inner (fast): the filter
            # block index is constant across batch steps, so it is only
            # re-fetched once per channel chunk.
            grid=(n_c, n_b),
            in_specs=[
                pl.BlockSpec((TB, TC, HW), lambda ci, bi: (bi, ci, 0)),
                pl.BlockSpec((TC, HW), lambda ci, bi: (ci, 0)),
            ],
            # Lane-dense (TB, TC) output; keepdims shape restored outside.
            out_specs=pl.BlockSpec((TB, TC), lambda ci, bi: (bi, ci)),
        ),
        compiler_params=pltpu.CompilerParams(
            dimension_semantics=("parallel", "parallel"),
            vmem_limit_bytes=vmem_limit,
        ),
    )(x2, f2)

    return out.reshape(B, C, 1, 1)


if __name__ == "__main__":
    B, C, H = 2, 4, 16  # small shapes consistent with the module
    key = jax.random.PRNGKey(0)
    k_filt, k_x, k_x2 = jax.random.split(key, 3)

    constant_filter = initialize_orthogonal_filters(C, H, H, k_filt)  # (C, H, H)

    # --- case 1: spatial dims match the filter ---
    x = jax.random.normal(k_x, (B, C, H, H), dtype=jnp.float32)       # (B, C, H, W)
    out = jax.block_until_ready(gram_schmidt_transform(x, constant_filter))
    ref = jnp.sum(constant_filter[None] * x, axis=(-1, -2), keepdims=True)
    assert out.shape == (B, C, 1, 1)
    assert jnp.allclose(out, ref, atol=1e-5, rtol=1e-5)

    # --- case 2: larger spatial dims -> pooling folded into the filter ---
    x_big = jax.random.normal(k_x2, (B, C, 2 * H, 2 * H), dtype=jnp.float32)
    out_big = jax.block_until_ready(gram_schmidt_transform(x_big, constant_filter))
    x_pooled = x_big.reshape(B, C, H, 2, H, 2).mean(axis=(3, 5))      # adaptive_avg_pool2d (int factor)
    ref_big = jnp.sum(constant_filter[None] * x_pooled, axis=(-1, -2), keepdims=True)
    assert out_big.shape == (B, C, 1, 1)
    assert jnp.allclose(out_big, ref_big, atol=1e-5, rtol=1e-5)

    print("KERNEL_OK")
</pallas_src>

<mosaic_0001>
module attributes {stable_mosaic.version = 11 : i64} {
  func.func @_gst_kernel(%arg0: i32, %arg1: i32, %arg2: memref<2x4x256xf32, #tpu.memory_space<vmem>>, %arg3: memref<4x256xf32, #tpu.memory_space<vmem>>, %arg4: memref<2x4xf32, #tpu.memory_space<vmem>>) attributes {dimension_semantics = [#tpu.dimension_semantics<parallel>, #tpu.dimension_semantics<parallel>], iteration_bounds = array<i64: 1, 1>, scalar_prefetch = 0 : i64, scratch_operands = 0 : i64, tpu.core_type = #tpu.core_type<tc>, window_params = [{transform_indices = @transform_0, window_bounds = array<i64: 2, 4, 256>}, {transform_indices = @transform_1, window_bounds = array<i64: 4, 256>}, {transform_indices = @transform_2, window_bounds = array<i64: 2, 4>}]} {
    %c0 = arith.constant 0 : index
    %c0_0 = arith.constant 0 : index
    %c0_1 = arith.constant 0 : index
    %0 = vector.load %arg2[%c0, %c0_0, %c0_1] : memref<2x4x256xf32, #tpu.memory_space<vmem>>, vector<2x4x256xf32>
    %c0_2 = arith.constant 0 : index
    %c0_3 = arith.constant 0 : index
    %1 = vector.load %arg3[%c0_2, %c0_3] : memref<4x256xf32, #tpu.memory_space<vmem>>, vector<4x256xf32>
    %2 = vector.shape_cast %1 : vector<4x256xf32> to vector<1x4x256xf32>
    %3 = vector.broadcast %2 : vector<1x4x256xf32> to vector<2x4x256xf32>
    %4 = arith.mulf %0, %3 : vector<2x4x256xf32>
    %cst = arith.constant dense<0.000000e+00> : vector<2x4xf32>
    %5 = vector.multi_reduction <add>, %4, %cst [2] : vector<2x4x256xf32> to vector<2x4xf32>
    %c0_4 = arith.constant 0 : index
    %c0_5 = arith.constant 0 : index
    %6 = vector.load %arg4[%c0_4, %c0_5] : memref<2x4xf32, #tpu.memory_space<vmem>>, vector<2x4xf32>
    tpu.vector_store %arg4[%c0_4, %c0_5], %5 {strides = array<i32>} : memref<2x4xf32, #tpu.memory_space<vmem>>, vector<2x4xf32>,
    return
  }
  func.func @transform_0(%arg0: i32, %arg1: i32) -> (i32, i32, i32) {
    %c0_i32 = arith.constant 0 : i32
    %c0_i32_0 = arith.constant 0 : i32
    return %arg1, %arg0, %c0_i32 : i32, i32, i32
  }
  func.func @transform_1(%arg0: i32, %arg1: i32) -> (i32, i32) {
    %c0_i32 = arith.constant 0 : i32
    %c0_i32_0 = arith.constant 0 : i32
    return %arg0, %c0_i32 : i32, i32
  }
  func.func @transform_2(%arg0: i32, %arg1: i32) -> (i32, i32) {
    %c0_i32 = arith.constant 0 : i32
    return %arg1, %arg0 : i32, i32
  }
}

</mosaic_0001>

<llo_original>
// kernel: tpu_custom_call.1
$region0: #{tpu_custom_call.1}
  #allocation0 [shape = 'u32[]', space=smem, size = 0x4, offset = 0x4, fixed_abs, tag = 'smem constant byte address 0x4 - core index']
  #allocation1 [shape = 'u32[144,128]{1,0:T(1,128)}', space=vmem, size = 0x12000, scoped, tag = 'internal scratch']
  %s0 = inlined_call_operand.hbm [shape: f32[2,4,256], index: 0, kind: input, shape index: {}]
  %s1 = inlined_call_operand.hbm [shape: f32[4,256], index: 1, kind: input, shape index: {}]
  %s2 = inlined_call_operand.hbm [shape: f32[2,4], index: 2, kind: output, shape index: {}]
  %s3 = sld [smem:[#allocation0]]
  $region26: #{tpu_custom_call.1} parent=0
    _
  %s5 = ssub.s32 1, %s3
  %s6 = scalar_select 0, %s5, %s3
  $region1: #{tpu_custom_call.1} parent=0
    #allocation2 [shape = 'u8[8192]{0}', space=vmem, size = 0x2000, scoped, tag = 'input window, operand 0, single buffered']
    #allocation3 [shape = 's32[1]{0}', space=sflag, size = 0x4, scoped, tag = 'scoped memory for tpu_custom_call.1']
    #allocation4 [shape = 's32[1]{0}', space=sflag, size = 0x4, scoped, tag = 'scoped memory for tpu_custom_call.1']
    #allocation5 [shape = 'u8[4096]{0}', space=vmem, size = 0x1000, scoped, tag = 'input window, operand 1, single buffered']
    #allocation6 [shape = 's32[1]{0}', space=sflag, size = 0x4, scoped, tag = 'scoped memory for tpu_custom_call.1']
    #allocation7 [shape = 'u8[1024]{0}', space=vmem, size = 0x400, scoped, tag = 'output window, operand 0, single buffered']
    %7 = vsyncpa [#allocation3], 0
    %8 = vsyncpa [#allocation6], 0
    %9 = vsyncpa [#allocation4], 0
    // Predicated region
    $region2: #{tpu_custom_call.1} parent=1 // pred_check
      _
    $region3: #{tpu_custom_call.1} parent=1 // pred_check_branch
      %11 = sbr.rel (0) target = $region5
    $region4: #{tpu_custom_call.1} parent=1 // pred_region
      %s13 = ssub.s32 256, 256
      %14 = vsyncadd [#allocation3], %s13
      %s15 = sshll.u32 [#allocation2], 4
      %s16 = int_to_ptr.vmem [resolvable:$true] %s15
      %21 = dma.hbm_to_vmem [thread:$0]  %s0, 256, %s16, [#allocation3], 128, 128, 8
    $region5: #{tpu_custom_call.1} parent=1 // pred_fallthru
      _
    // Predicated region
    $region6: #{tpu_custom_call.1} parent=1 // pred_check
      _
    $region7: #{tpu_custom_call.1} parent=1 // pred_check_branch
      %23 = sbr.rel (0) target = $region9
    $region8: #{tpu_custom_call.1} parent=1 // pred_region
      %s25 = ssub.s32 128, 128
      %26 = vsyncadd [#allocation6], %s25
      %s28 = sshll.u32 [#allocation5], 4
      %s29 = int_to_ptr.vmem [resolvable:$true] %s28
      %31 = dma.hbm_to_vmem [thread:$0]  %s1, 128, %s29, [#allocation6]
    $region9: #{tpu_custom_call.1} parent=1 // pred_fallthru
      _
    // Predicated region
    $region10: #{tpu_custom_call.1} parent=1 // pred_check
      _
    $region11: #{tpu_custom_call.1} parent=1 // pred_check_branch
      %33 = sbr.rel (0) target = $region13
    $region12: #{tpu_custom_call.1} parent=1 // pred_region
      %34 = dma.done [#allocation3], 256
    $region13: #{tpu_custom_call.1} parent=1 // pred_fallthru
      _
    // Predicated region
    $region14: #{tpu_custom_call.1} parent=1 // pred_check
      _
    $region15: #{tpu_custom_call.1} parent=1 // pred_check_branch
      %36 = sbr.rel (0) target = $region17
    $region16: #{tpu_custom_call.1} parent=1 // pred_region
      %37 = dma.done [#allocation6], 128
    $region17: #{tpu_custom_call.1} parent=1 // pred_fallthru
      _
    %v38 = vld [vmem:[#allocation2] sm:$0xff]
    %v39 = vld [vmem:[#allocation2 + $0x8] sm:$0xff]
    %v40 = vld [vmem:[#allocation5] sm:$0xff]
    %v41 = vmul.f32 %v38, %v40
    %v42 = vmul.f32 %v39, %v40
    %v45 = vcombine.high %v41, %v41
    %v46 = vcombine.high %v42, %v42
    %vm49 = vcmask 1043456
    %v50 = vsel %vm49, %v41, 0.0
    %v51 = vsel %vm49, %v45, 0.0
    %v52 = vadd.f32 %v50, %v51
    %53 = vadd.xlane.f32.xlu0 %v52
    %v54 = vpop.xlane.xlu0 %53
    %v55 = vsel %vm49, %v42, 0.0
    %v56 = vsel %vm49, %v46, 0.0
    %v57 = vadd.f32 %v55, %v56
    %58 = vadd.xlane.f32.xlu0 %v57
    %v59 = vpop.xlane.xlu0 %58
    %v62 = vlaneseq
    %v63 = vand.u32 %v62, 127
    %v64 = vlaneseq
    %v65 = vshrl.u32 %v64, 7
    %v66 = vsub.s32 %v63, %v65
    %v67 = vrot.slane %v54, %v66
    %v68 = vlaneseq
    %v69 = vshrl.u32 %v68, 7
    %v70 = vsub.s32 %v63, %v69
    %v71 = vrot.slane %v59, %v70
    %vm72 = vcmask 1041409
    %v73 = vsel %vm72, %v71, %v67
    %vm75 = vcmask 25600
    %76 = vst.msk [vmem:[#allocation7] sm:$0x3] %vm75, %v73
    // Predicated region
    $region18: #{tpu_custom_call.1} parent=1 // pred_check
      _
    $region19: #{tpu_custom_call.1} parent=1 // pred_check_branch
      %78 = sbr.rel (0) target = $region21
    $region20: #{tpu_custom_call.1} parent=1 // pred_region
      %s80 = ssub.s32 32, 32
      %81 = vsyncadd [#allocation4], %s80
      %s83 = sshll.u32 [#allocation7], 4
      %s84 = int_to_ptr.vmem [resolvable:$true] %s83
      %86 = dma.vmem_to_hbm [thread:$0]  %s84, 32, %s2, [#allocation4]
    $region21: #{tpu_custom_call.1} parent=1 // pred_fallthru
      _
    // Predicated region
    $region22: #{tpu_custom_call.1} parent=1 // pred_check
      _
    $region23: #{tpu_custom_call.1} parent=1 // pred_check_branch
      %88 = sbr.rel (0) target = $region25
    $region24: #{tpu_custom_call.1} parent=1 // pred_region
      %89 = dma.done [#allocation4], 32
    $region25: #{tpu_custom_call.1} parent=1 // pred_fallthru
      _
    %90 = vsyncpa [#allocation3], 1
    %91 = vsyncpa [#allocation6], 1
    %92 = vsyncpa [#allocation4], 1

</llo_original>
